<compile_context>
chip_gen: v6e
topology: v6e:2x2x1
jax: 0.10.0
libtpu: 0.0.40
codegen_flags: <defaults>
</compile_context>

<pallas_src>
import functools

import jax
import jax.numpy as jnp
from jax.experimental import pallas as pl
from jax.experimental.pallas import tpu as pltpu


# ----------------------------------------------------------------------------
# Generation-aware VMEM budget & tile sizing helpers.
# ----------------------------------------------------------------------------
@functools.lru_cache(maxsize=None)
def _vmem_limit_bytes():
    """Scoped-VMEM limit: 48 MiB on 128-MiB parts (v5e/v6e), 36 MiB on 64-MiB
    parts (v7x-class) so Mosaic internal scratch / the 2nd TC keep headroom."""
    cap = 128 * 1024 * 1024
    try:
        cap = int(pltpu.get_tpu_info().vmem_capacity_bytes)
    except Exception:
        pass
    if cap <= 64 * 1024 * 1024:
        return 36 * 1024 * 1024
    return 48 * 1024 * 1024


def _pick_tile(extent, cap, *, must_divide, unit=8):
    """Largest `unit`-multiple tile <= cap that divides `extent`.  Falls back to
    the full extent (must_divide=True, e.g. the softmax KV axis) or to the cap
    (row/column-independent kernels, where padded blocks are simply dropped)."""
    if extent <= cap:
        return extent
    t = (cap // unit) * unit
    while t >= unit:
        if extent % t == 0:
            return t
        t -= unit
    return extent if must_divide else max((cap // unit) * unit, unit)


def _fit_cap(per_row_bytes, fixed_bytes, vmem_limit, start=1024, floor=8):
    """Largest power-of-two row cap (<= start) whose per-step footprint fits in
    ~70% of the VMEM limit."""
    budget = int(vmem_limit * 0.7)
    cap = start
    while cap > floor and fixed_bytes + cap * per_row_bytes > budget:
        cap //= 2
    return max(cap, floor)


@functools.lru_cache(maxsize=None)
def _single_buffer_supported():
    """Probe once whether pipeline_mode=pl.Buffered(1) compiles on this backend."""
    if not hasattr(pl, "Buffered"):
        return False
    try:
        def _k(x_ref, o_ref):
            o_ref[...] = x_ref[...] + 1.0

        fn = pl.pallas_call(
            _k,
            grid=(2,),
            in_specs=[pl.BlockSpec((8, 128), lambda i: (0, 0),
                                   pipeline_mode=pl.Buffered(1))],
            out_specs=pl.BlockSpec((8, 128), lambda i: (i, 0)),
            out_shape=jax.ShapeDtypeStruct((16, 128), jnp.float32),
        )
        jax.block_until_ready(fn(jnp.zeros((8, 128), jnp.float32)))
        return True
    except Exception:
        return False


def _resident_spec(block_shape, index_map):
    """Resident (constant index_map) block: single-buffer it when supported,
    halving its VMEM footprint; otherwise fall back to the default double buffer."""
    if _single_buffer_supported():
        return pl.BlockSpec(block_shape, index_map, pipeline_mode=pl.Buffered(1))
    return pl.BlockSpec(block_shape, index_map)


# ----------------------------------------------------------------------------
# Kernel 1: fused QKV projection   qkv = x2d @ [Wq^T | Wk^T | Wv^T]
# Grid over (row tiles, output-column tiles).  Inputs are pre-cast in the
# wrapper, so no per-tile casts here; MXU accumulates fp32.
# ----------------------------------------------------------------------------
def _qkv_kernel(x_ref, w_ref, o_ref):
    o_ref[...] = jnp.dot(x_ref[...], w_ref[...],
                         preferred_element_type=jnp.float32).astype(o_ref.dtype)


def fused_qkv_proj(x2d, w_qkv_t, vmem_limit):
    M, D = x2d.shape
    Dout = w_qkv_t.shape[1]
    a_b = jnp.dtype(x2d.dtype).itemsize
    w_b = jnp.dtype(w_qkv_t.dtype).itemsize

    # Column tile: multiple of 128 (feeds both 128- and 256-wide MXUs), or the
    # full 3D extent when small.
    tn = _pick_tile(Dout, 512, must_divide=False, unit=128)
    budget = int(vmem_limit * 0.7)
    if tn % 128 == 0:
        while tn > 128 and 2 * D * tn * w_b > budget // 2:
            tn = max(128, tn // 2)

    fixed = 2 * D * tn * w_b                      # streamed weight block (dbl-buffered)
    per_row = 2 * (D * a_b + tn * a_b)            # x block + out block (dbl-buffered)
    tm = _pick_tile(M, _fit_cap(per_row, fixed, vmem_limit), must_divide=False)

    return pl.pallas_call(
        _qkv_kernel,
        grid=(pl.cdiv(M, tm), pl.cdiv(Dout, tn)),
        in_specs=[
            pl.BlockSpec((tm, D), lambda i, j: (i, 0)),   # x row tile (resident over j)
            pl.BlockSpec((D, tn), lambda i, j: (0, j)),   # weight column tile
        ],
        out_specs=pl.BlockSpec((tm, tn), lambda i, j: (i, j)),
        out_shape=jax.ShapeDtypeStruct((M, Dout), x2d.dtype),
        compiler_params=pltpu.CompilerParams(
            dimension_semantics=("parallel", "parallel"),
            vmem_limit_bytes=vmem_limit,
        ),
    )(x2d, w_qkv_t)


# ----------------------------------------------------------------------------
# Kernel 2: flash-style scaled dot-product attention (online softmax).
# Grid = (B*H, q_tiles, kv_tiles); kv axis is "arbitrary" (accumulation),
# fp32 m/l/acc scratch persists across the kv sweep.
# ----------------------------------------------------------------------------
def _flash_attn_kernel(q_ref, k_ref, v_ref, o_ref, m_sc, l_sc, acc_sc,
                       *, scale, mxu_dtype, approx_recip):
    kv = pl.program_id(2)

    @pl.when(kv == 0)
    def _():
        m_sc[...] = jnp.full(m_sc.shape, -jnp.inf, dtype=m_sc.dtype)
        l_sc[...] = jnp.zeros(l_sc.shape, dtype=l_sc.dtype)
        acc_sc[...] = jnp.zeros(acc_sc.shape, dtype=acc_sc.dtype)

    # Scale q (tq*dh elements) instead of the (tq, tk) score tensor.
    q = (q_ref[0] * scale).astype(mxu_dtype)             # (tq, dh)
    k = k_ref[0]                                          # (tk, dh)
    v = v_ref[0]                                          # (tk, dh)

    # Contract on the last dim (no explicit K transpose).
    s = jnp.einsum("qd,kd->qk", q, k,
                   preferred_element_type=jnp.float32)    # (tq, tk) fp32

    m_prev = m_sc[...]
    m_new = jnp.maximum(m_prev, jnp.max(s, axis=-1, keepdims=True))
    alpha = jnp.exp(m_prev - m_new)
    p = jnp.exp(s - m_new)
    l_sc[...] = alpha * l_sc[...] + jnp.sum(p, axis=-1, keepdims=True)
    acc_sc[...] = alpha * acc_sc[...] + jnp.dot(
        p.astype(mxu_dtype), v, preferred_element_type=jnp.float32)
    m_sc[...] = m_new

    @pl.when(kv == pl.num_programs(2) - 1)
    def _():
        if approx_recip:
            inv = pl.reciprocal(l_sc[...], approx=True)   # EUP slot
        else:
            inv = 1.0 / l_sc[...]
        o_ref[0] = (acc_sc[...] * inv).astype(o_ref.dtype)


def _attn_seq_tiles(L, dh, act_bytes, vmem_limit):
    budget = int(vmem_limit * 0.6)
    t = 512

    def need(t):
        io = 2 * 4 * t * dh * act_bytes          # q, k, v, out blocks, double-buffered
        scratch = t * (dh + 2) * 4               # m, l, acc (fp32)
        temps = 3 * t * t * 4                    # s / p / exp temporaries (fp32)
        return io + scratch + temps

    while t > 128 and need(t) > budget:
        t //= 2
    tq = _pick_tile(L, t, must_divide=False)     # query rows are independent
    tk = _pick_tile(L, t, must_divide=True)      # KV tiles must tile L exactly
    return tq, tk


def flash_attention(qh, kh, vh, scale, vmem_limit, *, mxu_dtype, approx_recip):
    BH, L, dh = qh.shape
    act_bytes = jnp.dtype(qh.dtype).itemsize
    tq, tk = _attn_seq_tiles(L, dh, act_bytes, vmem_limit)

    q_spec = pl.BlockSpec((1, tq, dh), lambda b, qi, ki: (b, qi, 0))
    kv_spec = pl.BlockSpec((1, tk, dh), lambda b, qi, ki: (b, ki, 0))

    return pl.pallas_call(
        functools.partial(_flash_attn_kernel, scale=scale,
                          mxu_dtype=mxu_dtype, approx_recip=approx_recip),
        grid=(BH, pl.cdiv(L, tq), L // tk),
        in_specs=[q_spec, kv_spec, kv_spec],
        out_specs=q_spec,
        out_shape=jax.ShapeDtypeStruct((BH, L, dh), qh.dtype),
        scratch_shapes=[
            pltpu.VMEM((tq, 1), jnp.float32),    # running max
            pltpu.VMEM((tq, 1), jnp.float32),    # running denom
            pltpu.VMEM((tq, dh), jnp.float32),   # fp32 accumulator
        ],
        compiler_params=pltpu.CompilerParams(
            dimension_semantics=("parallel", "parallel", "arbitrary"),
            vmem_limit_bytes=vmem_limit,
        ),
    )(qh, kh, vh)


# ----------------------------------------------------------------------------
# Kernel 3: output projection + residual + LayerNorm (fp32 math), row-tiled.
#   out = LayerNorm(ctx @ Wfc^T + x)
# ----------------------------------------------------------------------------
def _out_ln_kernel(ctx_ref, x_ref, w_ref, g_ref, b_ref, o_ref, *, eps):
    y = jnp.dot(ctx_ref[...], w_ref[...], preferred_element_type=jnp.float32)
    y = y + x_ref[...].astype(jnp.float32)
    mean = jnp.mean(y, axis=-1, keepdims=True)
    var = jnp.mean(jnp.square(y - mean), axis=-1, keepdims=True)   # biased, like torch LN
    yn = (y - mean) * jax.lax.rsqrt(var + eps)
    o_ref[...] = (yn * g_ref[...].astype(jnp.float32)
                  + b_ref[...].astype(jnp.float32)).astype(o_ref.dtype)


def out_proj_residual_ln(ctx2d, x2d, w_fc_t, gamma, beta, vmem_limit,
                         *, out_dtype, eps=1e-5):
    M, D = x2d.shape
    c_b = jnp.dtype(ctx2d.dtype).itemsize
    x_b = jnp.dtype(x2d.dtype).itemsize
    w_b = jnp.dtype(w_fc_t.dtype).itemsize
    o_b = jnp.dtype(out_dtype).itemsize

    wbufs = 1 if _single_buffer_supported() else 2
    fixed = wbufs * (D * D * w_b + 2 * D * 4)           # resident weight + gamma/beta
    per_row = 2 * D * (c_b + x_b + o_b)                 # ctx + x + out, double-buffered
    tm = _pick_tile(M, _fit_cap(per_row, fixed, vmem_limit), must_divide=False)

    row = lambda i: (i, 0)
    const = lambda i: (0, 0)

    return pl.pallas_call(
        functools.partial(_out_ln_kernel, eps=eps),
        grid=(pl.cdiv(M, tm),),
        in_specs=[
            pl.BlockSpec((tm, D), row),                 # ctx (compute dtype)
            pl.BlockSpec((tm, D), row),                 # x residual (fp32)
            _resident_spec((D, D), const),              # W_fc^T, single-buffered
            _resident_spec((1, D), const),              # gamma
            _resident_spec((1, D), const),              # beta
        ],
        out_specs=pl.BlockSpec((tm, D), row),
        out_shape=jax.ShapeDtypeStruct((M, D), out_dtype),
        compiler_params=pltpu.CompilerParams(
            dimension_semantics=("parallel",),
            vmem_limit_bytes=vmem_limit,
        ),
    )(ctx2d, x2d, w_fc_t,
      gamma.reshape(1, D).astype(jnp.float32),
      beta.reshape(1, D).astype(jnp.float32))


# ----------------------------------------------------------------------------
# Full MultiHeadAttention forward (glue reshapes in plain JAX, hot paths Pallas)
# ----------------------------------------------------------------------------
def multi_head_attention(x, params, num_head, compute_dtype=jnp.bfloat16):
    B, L, D = x.shape
    dim_head = D // num_head
    vmem_limit = _vmem_limit_bytes()

    # Fuse / transpose / pre-cast weights ONCE in the wrapper (nn.Linear: y = x @ W.T).
    w_qkv_t = jnp.concatenate(
        [params["W_Q"].T, params["W_K"].T, params["W_V"].T], axis=1
    ).astype(compute_dtype)                                          # (D, 3D)
    w_fc_t = params["W_fc"].T.astype(compute_dtype)                  # (D, D)

    x2d = x.reshape(B * L, D)                 # fp32 copy kept for residual + LN
    x_mm = x2d.astype(compute_dtype)          # MXU-feed copy (bf16 in the perf config)

    qkv = fused_qkv_proj(x_mm, w_qkv_t, vmem_limit)                  # (B*L, 3D), compute dtype

    # Exact reproduction of torch .view(B*num_head, -1, dim_head) (no transpose):
    # plain row-major reshape of the (B*L, D) slab.
    Qh = qkv[:, 0 * D:1 * D].reshape(B * num_head, L, dim_head)
    Kh = qkv[:, 1 * D:2 * D].reshape(B * num_head, L, dim_head)
    Vh = qkv[:, 2 * D:3 * D].reshape(B * num_head, L, dim_head)

    scale = float(dim_head) ** (-0.5)
    context = flash_attention(
        Qh, Kh, Vh, scale, vmem_limit,
        mxu_dtype=compute_dtype,
        approx_recip=(compute_dtype != jnp.float32))                 # (B*H, L, dh)

    # torch: context.view(B, -1, H*dh)  ==  row-major reshape to (B*L, D).
    ctx2d = context.reshape(B * L, D)

    out2d = out_proj_residual_ln(
        ctx2d, x2d, w_fc_t, params["ln_gamma"], params["ln_beta"],
        vmem_limit, out_dtype=x.dtype)
    return out2d.reshape(B, L, D)


# ----------------------------------------------------------------------------
# Pure-JAX reference for the correctness check.
# ----------------------------------------------------------------------------
def reference(x, params, num_head):
    B, L, D = x.shape
    dim_head = D // num_head
    Q = x @ params["W_Q"].T
    K = x @ params["W_K"].T
    V = x @ params["W_V"].T
    Qh = Q.reshape(B * num_head, -1, dim_head)
    Kh = K.reshape(B * num_head, -1, dim_head)
    Vh = V.reshape(B * num_head, -1, dim_head)
    scale = float(dim_head) ** (-0.5)
    att = jnp.einsum("bqd,bkd->bqk", Qh, Kh) * scale
    att = jax.nn.softmax(att, axis=-1)
    ctx = jnp.einsum("bqk,bkd->bqd", att, Vh).reshape(B, -1, D)
    y = ctx @ params["W_fc"].T + x
    mean = jnp.mean(y, axis=-1, keepdims=True)
    var = jnp.mean((y - mean) ** 2, axis=-1, keepdims=True)
    yn = (y - mean) / jnp.sqrt(var + 1e-5)
    return yn * params["ln_gamma"] + params["ln_beta"]


if __name__ == "__main__":
    B, L, D, H = 2, 8, 32, 4

    key = jax.random.PRNGKey(0)
    kx, kq, kk, kv, kf, kg, kb = jax.random.split(key, 7)

    x = jax.random.normal(kx, (B, L, D), dtype=jnp.float32)
    params = {
        "W_Q": jax.random.normal(kq, (D, D), dtype=jnp.float32) * (D ** -0.5),
        "W_K": jax.random.normal(kk, (D, D), dtype=jnp.float32) * (D ** -0.5),
        "W_V": jax.random.normal(kv, (D, D), dtype=jnp.float32) * (D ** -0.5),
        "W_fc": jax.random.normal(kf, (D, D), dtype=jnp.float32) * (D ** -0.5),
        "ln_gamma": 1.0 + 0.1 * jax.random.normal(kg, (D,), dtype=jnp.float32),
        "ln_beta": 0.1 * jax.random.normal(kb, (D,), dtype=jnp.float32),
    }

    ref = reference(x, params, H)

    mha = jax.jit(multi_head_attention, static_argnums=(2, 3))

    # fp32-fed run: tight structural correctness check (exact softmax division).
    out_f32 = jax.block_until_ready(mha(x, params, H, jnp.float32))
    assert out_f32.shape == (B, L, D)
    assert jnp.allclose(out_f32, ref, atol=5e-3, rtol=5e-3), "fp32 path mismatch"

    # bf16-fed run (the performance configuration: bf16 weights/intermediates,
    # fp32 MXU accumulation, fp32 softmax/LN math, approx reciprocal).
    out_bf16 = jax.block_until_ready(mha(x, params, H, jnp.bfloat16))
    assert out_bf16.shape == (B, L, D)
    assert jnp.allclose(out_bf16, ref, atol=1e-1, rtol=1e-1), "bf16 path mismatch"

    print("KERNEL_OK")
</pallas_src>

<mosaic_0001>
module attributes {stable_mosaic.version = 11 : i64} {
  func.func @_qkv_kernel(%arg0: i32, %arg1: i32, %arg2: memref<16x32xf32, #tpu.memory_space<vmem>>, %arg3: memref<32x96xf32, #tpu.memory_space<vmem>>, %arg4: memref<16x96xf32, #tpu.memory_space<vmem>>) attributes {dimension_semantics = [#tpu.dimension_semantics<parallel>, #tpu.dimension_semantics<parallel>], iteration_bounds = array<i64: 1, 1>, scalar_prefetch = 0 : i64, scratch_operands = 0 : i64, tpu.core_type = #tpu.core_type<tc>, window_params = [{transform_indices = @transform_0, window_bounds = array<i64: 16, 32>}, {transform_indices = @transform_1, window_bounds = array<i64: 32, 96>}, {transform_indices = @transform_2, window_bounds = array<i64: 16, 96>}]} {
    %c0 = arith.constant 0 : index
    %c0_0 = arith.constant 0 : index
    %0 = vector.load %arg2[%c0, %c0_0] : memref<16x32xf32, #tpu.memory_space<vmem>>, vector<16x32xf32>
    %c0_1 = arith.constant 0 : index
    %c0_2 = arith.constant 0 : index
    %1 = vector.load %arg3[%c0_1, %c0_2] : memref<32x96xf32, #tpu.memory_space<vmem>>, vector<32x96xf32>
    %cst = arith.constant dense<0.000000e+00> : vector<16x96xf32>
    %2 = tpu.matmul %0, %1, %cst {dimension_numbers = #tpu.dot_dimension_numbers<[1], [0], [0], [1], [0, 0, 1, 1], [], []>} : vector<16x32xf32>, vector<32x96xf32>, vector<16x96xf32> -> vector<16x96xf32>
    %c0_3 = arith.constant 0 : index
    %c0_4 = arith.constant 0 : index
    %3 = vector.load %arg4[%c0_3, %c0_4] : memref<16x96xf32, #tpu.memory_space<vmem>>, vector<16x96xf32>
    tpu.vector_store %arg4[%c0_3, %c0_4], %2 {strides = array<i32>} : memref<16x96xf32, #tpu.memory_space<vmem>>, vector<16x96xf32>,
    return
  }
  func.func @transform_0(%arg0: i32, %arg1: i32) -> (i32, i32) {
    %c0_i32 = arith.constant 0 : i32
    %c0_i32_0 = arith.constant 0 : i32
    return %arg0, %c0_i32 : i32, i32
  }
  func.func @transform_1(%arg0: i32, %arg1: i32) -> (i32, i32) {
    %c0_i32 = arith.constant 0 : i32
    %c0_i32_0 = arith.constant 0 : i32
    return %c0_i32, %arg1 : i32, i32
  }
  func.func @transform_2(%arg0: i32, %arg1: i32) -> (i32, i32) {
    %c0_i32 = arith.constant 0 : i32
    return %arg0, %arg1 : i32, i32
  }
}

module attributes {stable_mosaic.version = 11 : i64} {
  func.func @_flash_attn_kernel(%arg0: i32, %arg1: i32, %arg2: i32, %arg3: memref<1x8x8xf32, #tpu.memory_space<vmem>>, %arg4: memref<1x8x8xf32, #tpu.memory_space<vmem>>, %arg5: memref<1x8x8xf32, #tpu.memory_space<vmem>>, %arg6: memref<1x8x8xf32, #tpu.memory_space<vmem>>, %arg7: memref<8x1xf32, #tpu.memory_space<vmem>>, %arg8: memref<8x1xf32, #tpu.memory_space<vmem>>, %arg9: memref<8x8xf32, #tpu.memory_space<vmem>>) attributes {dimension_semantics = [#tpu.dimension_semantics<parallel>, #tpu.dimension_semantics<parallel>, #tpu.dimension_semantics<arbitrary>], iteration_bounds = array<i64: 8, 1, 1>, scalar_prefetch = 0 : i64, scratch_operands = 3 : i64, tpu.core_type = #tpu.core_type<tc>, window_params = [{transform_indices = @transform_0, window_bounds = array<i64: 1, 8, 8>}, {transform_indices = @transform_1, window_bounds = array<i64: 1, 8, 8>}, {transform_indices = @transform_2, window_bounds = array<i64: 1, 8, 8>}, {transform_indices = @transform_3, window_bounds = array<i64: 1, 8, 8>}]} {
    %c0_i32 = arith.constant 0 : i32
    %0 = arith.cmpi eq, %arg2, %c0_i32 : i32
    %1 = arith.extui %0 : i1 to i32
    %c0_i32_0 = arith.constant 0 : i32
    %2 = arith.cmpi ne, %1, %c0_i32_0 : i32
    scf.if %2 {
      %cst_27 = arith.constant 0xFF800000 : f32
      %37 = vector.broadcast %cst_27 : f32 to vector<8x1xf32>
      %c0_28 = arith.constant 0 : index
      %c0_29 = arith.constant 0 : index
      %38 = vector.load %arg7[%c0_28, %c0_29] : memref<8x1xf32, #tpu.memory_space<vmem>>, vector<8x1xf32>
      tpu.vector_store %arg7[%c0_28, %c0_29], %37 {strides = array<i32>} : memref<8x1xf32, #tpu.memory_space<vmem>>, vector<8x1xf32>,
      %cst_30 = arith.constant 0.000000e+00 : f32
      %39 = vector.broadcast %cst_30 : f32 to vector<8x1xf32>
      %c0_31 = arith.constant 0 : index
      %c0_32 = arith.constant 0 : index
      %40 = vector.load %arg8[%c0_31, %c0_32] : memref<8x1xf32, #tpu.memory_space<vmem>>, vector<8x1xf32>
      tpu.vector_store %arg8[%c0_31, %c0_32], %39 {strides = array<i32>} : memref<8x1xf32, #tpu.memory_space<vmem>>, vector<8x1xf32>,
      %cst_33 = arith.constant 0.000000e+00 : f32
      %41 = vector.broadcast %cst_33 : f32 to vector<8x8xf32>
      %c0_34 = arith.constant 0 : index
      %c0_35 = arith.constant 0 : index
      %42 = vector.load %arg9[%c0_34, %c0_35] : memref<8x8xf32, #tpu.memory_space<vmem>>, vector<8x8xf32>
      tpu.vector_store %arg9[%c0_34, %c0_35], %41 {strides = array<i32>} : memref<8x8xf32, #tpu.memory_space<vmem>>, vector<8x8xf32>,
    } else {
    }
    %c0 = arith.constant 0 : index
    %c0_1 = arith.constant 0 : index
    %c0_2 = arith.constant 0 : index
    %3 = vector.load %arg3[%c0, %c0_1, %c0_2] : memref<1x8x8xf32, #tpu.memory_space<vmem>>, vector<1x8x8xf32>
    %4 = vector.shape_cast %3 : vector<1x8x8xf32> to vector<8x8xf32>
    %cst = arith.constant 0.353553385 : f32
    %5 = vector.broadcast %cst : f32 to vector<8x8xf32>
    %6 = arith.mulf %4, %5 : vector<8x8xf32>
    %c0_3 = arith.constant 0 : index
    %c0_4 = arith.constant 0 : index
    %c0_5 = arith.constant 0 : index
    %7 = vector.load %arg4[%c0_3, %c0_4, %c0_5] : memref<1x8x8xf32, #tpu.memory_space<vmem>>, vector<1x8x8xf32>
    %8 = vector.shape_cast %7 : vector<1x8x8xf32> to vector<8x8xf32>
    %c0_6 = arith.constant 0 : index
    %c0_7 = arith.constant 0 : index
    %c0_8 = arith.constant 0 : index
    %9 = vector.load %arg5[%c0_6, %c0_7, %c0_8] : memref<1x8x8xf32, #tpu.memory_space<vmem>>, vector<1x8x8xf32>
    %10 = vector.shape_cast %9 : vector<1x8x8xf32> to vector<8x8xf32>
    "tpu.trace_start"() <{level = 10 : i32, message = "qd,kd->qk"}> : () -> ()
    %cst_9 = arith.constant dense<0.000000e+00> : vector<8x8xf32>
    %11 = tpu.matmul %6, %8, %cst_9 {dimension_numbers = #tpu.dot_dimension_numbers<[1], [1], [0], [0], [0, 0, 1, 0], [], []>} : vector<8x8xf32>, vector<8x8xf32>, vector<8x8xf32> -> vector<8x8xf32>
    "tpu.trace_stop"() : () -> ()
    %c0_10 = arith.constant 0 : index
    %c0_11 = arith.constant 0 : index
    %12 = vector.load %arg7[%c0_10, %c0_11] : memref<8x1xf32, #tpu.memory_space<vmem>>, vector<8x1xf32>
    %cst_12 = arith.constant dense<0xFF800000> : vector<8xf32>
    %13 = vector.multi_reduction <maximumf>, %11, %cst_12 [1] : vector<8x8xf32> to vector<8xf32>
    %14 = vector.shape_cast %13 : vector<8xf32> to vector<8x1xf32>
    %15 = arith.maximumf %12, %14 : vector<8x1xf32>
    %16 = arith.subf %12, %15 : vector<8x1xf32>
    %17 = math.exp %16 : vector<8x1xf32>
    %18 = vector.broadcast %15 : vector<8x1xf32> to vector<8x8xf32>
    %19 = arith.subf %11, %18 : vector<8x8xf32>
    %20 = math.exp %19 : vector<8x8xf32>
    %c0_13 = arith.constant 0 : index
    %c0_14 = arith.constant 0 : index
    %21 = vector.load %arg8[%c0_13, %c0_14] : memref<8x1xf32, #tpu.memory_space<vmem>>, vector<8x1xf32>
    %22 = arith.mulf %17, %21 : vector<8x1xf32>
    %cst_15 = arith.constant dense<0.000000e+00> : vector<8xf32>
    %23 = vector.multi_reduction <add>, %20, %cst_15 [1] : vector<8x8xf32> to vector<8xf32>
    %24 = vector.shape_cast %23 : vector<8xf32> to vector<8x1xf32>
    %25 = arith.addf %22, %24 : vector<8x1xf32>
    %c0_16 = arith.constant 0 : index
    %c0_17 = arith.constant 0 : index
    %26 = vector.load %arg8[%c0_16, %c0_17] : memref<8x1xf32, #tpu.memory_space<vmem>>, vector<8x1xf32>
    tpu.vector_store %arg8[%c0_16, %c0_17], %25 {strides = array<i32>} : memref<8x1xf32, #tpu.memory_space<vmem>>, vector<8x1xf32>,
    %c0_18 = arith.constant 0 : index
    %c0_19 = arith.constant 0 : index
    %27 = vector.load %arg9[%c0_18, %c0_19] : memref<8x8xf32, #tpu.memory_space<vmem>>, vector<8x8xf32>
    %28 = vector.broadcast %17 : vector<8x1xf32> to vector<8x8xf32>
    %29 = arith.mulf %28, %27 : vector<8x8xf32>
    %cst_20 = arith.constant dense<0.000000e+00> : vector<8x8xf32>
    %30 = tpu.matmul %20, %10, %cst_20 {dimension_numbers = #tpu.dot_dimension_numbers<[1], [0], [0], [1], [0, 0, 1, 1], [], []>} : vector<8x8xf32>, vector<8x8xf32>, vector<8x8xf32> -> vector<8x8xf32>
    %31 = arith.addf %29, %30 : vector<8x8xf32>
    %c0_21 = arith.constant 0 : index
    %c0_22 = arith.constant 0 : index
    %32 = vector.load %arg9[%c0_21, %c0_22] : memref<8x8xf32, #tpu.memory_space<vmem>>, vector<8x8xf32>
    tpu.vector_store %arg9[%c0_21, %c0_22], %31 {strides = array<i32>} : memref<8x8xf32, #tpu.memory_space<vmem>>, vector<8x8xf32>,
    %c0_23 = arith.constant 0 : index
    %c0_24 = arith.constant 0 : index
    %33 = vector.load %arg7[%c0_23, %c0_24] : memref<8x1xf32, #tpu.memory_space<vmem>>, vector<8x1xf32>
    tpu.vector_store %arg7[%c0_23, %c0_24], %15 {strides = array<i32>} : memref<8x1xf32, #tpu.memory_space<vmem>>, vector<8x1xf32>,
    %c0_i32_25 = arith.constant 0 : i32
    %34 = arith.cmpi eq, %arg2, %c0_i32_25 : i32
    %35 = arith.extui %34 : i1 to i32
    %c0_i32_26 = arith.constant 0 : i32
    %36 = arith.cmpi ne, %35, %c0_i32_26 : i32
    scf.if %36 {
      %c0_27 = arith.constant 0 : index
      %c0_28 = arith.constant 0 : index
      %37 = vector.load %arg8[%c0_27, %c0_28] : memref<8x1xf32, #tpu.memory_space<vmem>>, vector<8x1xf32>
      %cst_29 = arith.constant 1.000000e+00 : f32
      %38 = vector.broadcast %cst_29 : f32 to vector<8x1xf32>
      %39 = arith.divf %38, %37 : vector<8x1xf32>
      %c0_30 = arith.constant 0 : index
      %c0_31 = arith.constant 0 : index
      %40 = vector.load %arg9[%c0_30, %c0_31] : memref<8x8xf32, #tpu.memory_space<vmem>>, vector<8x8xf32>
      %41 = vector.broadcast %39 : vector<8x1xf32> to vector<8x8xf32>
      %42 = arith.mulf %40, %41 : vector<8x8xf32>
      %c0_32 = arith.constant 0 : index
      %c0_33 = arith.constant 0 : index
      %c0_34 = arith.constant 0 : index
      %43 = vector.load %arg6[%c0_32, %c0_33, %c0_34] : memref<1x8x8xf32, #tpu.memory_space<vmem>>, vector<1x8x8xf32>
      %44 = vector.shape_cast %43 : vector<1x8x8xf32> to vector<8x8xf32>
      %45 = vector.shape_cast %42 : vector<8x8xf32> to vector<1x8x8xf32>
      tpu.vector_store %arg6[%c0_32, %c0_33, %c0_34], %45 {strides = array<i32>} : memref<1x8x8xf32, #tpu.memory_space<vmem>>, vector<1x8x8xf32>,
    } else {
    }
    return
  }
  func.func @transform_0(%arg0: i32, %arg1: i32, %arg2: i32) -> (i32, i32, i32) {
    %c0_i32 = arith.constant 0 : i32
    %c0_i32_0 = arith.constant 0 : i32
    return %arg0, %arg1, %c0_i32 : i32, i32, i32
  }
  func.func @transform_1(%arg0: i32, %arg1: i32, %arg2: i32) -> (i32, i32, i32) {
    %c0_i32 = arith.constant 0 : i32
    %c0_i32_0 = arith.constant 0 : i32
    return %arg0, %arg2, %c0_i32 : i32, i32, i32
  }
  func.func @transform_2(%arg0: i32, %arg1: i32, %arg2: i32) -> (i32, i32, i32) {
    %c0_i32 = arith.constant 0 : i32
    %c0_i32_0 = arith.constant 0 : i32
    return %arg0, %arg2, %c0_i32 : i32, i32, i32
  }
  func.func @transform_3(%arg0: i32, %arg1: i32, %arg2: i32) -> (i32, i32, i32) {
    %c0_i32 = arith.constant 0 : i32
    %c0_i32_0 = arith.constant 0 : i32
    return %arg0, %arg1, %c0_i32 : i32, i32, i32
  }
}

module attributes {stable_mosaic.version = 11 : i64} {
  func.func @_out_ln_kernel(%arg0: i32, %arg1: memref<16x32xf32, #tpu.memory_space<vmem>>, %arg2: memref<16x32xf32, #tpu.memory_space<vmem>>, %arg3: memref<32x32xf32, #tpu.memory_space<vmem>>, %arg4: memref<1x32xf32, #tpu.memory_space<vmem>>, %arg5: memref<1x32xf32, #tpu.memory_space<vmem>>, %arg6: memref<16x32xf32, #tpu.memory_space<vmem>>) attributes {dimension_semantics = [#tpu.dimension_semantics<parallel>], iteration_bounds = array<i64: 1>, scalar_prefetch = 0 : i64, scratch_operands = 0 : i64, tpu.core_type = #tpu.core_type<tc>, window_params = [{transform_indices = @transform_0, window_bounds = array<i64: 16, 32>}, {transform_indices = @transform_1, window_bounds = array<i64: 16, 32>}, {pipeline_mode = #tpu.pipeline_mode<synchronous>, transform_indices = @transform_2, window_bounds = array<i64: 32, 32>}, {pipeline_mode = #tpu.pipeline_mode<synchronous>, transform_indices = @transform_3, window_bounds = array<i64: 1, 32>}, {pipeline_mode = #tpu.pipeline_mode<synchronous>, transform_indices = @transform_4, window_bounds = array<i64: 1, 32>}, {transform_indices = @transform_5, window_bounds = array<i64: 16, 32>}]} {
    %c0 = arith.constant 0 : index
    %c0_0 = arith.constant 0 : index
    %0 = vector.load %arg1[%c0, %c0_0] : memref<16x32xf32, #tpu.memory_space<vmem>>, vector<16x32xf32>
    %c0_1 = arith.constant 0 : index
    %c0_2 = arith.constant 0 : index
    %1 = vector.load %arg3[%c0_1, %c0_2] : memref<32x32xf32, #tpu.memory_space<vmem>>, vector<32x32xf32>
    %cst = arith.constant dense<0.000000e+00> : vector<16x32xf32>
    %2 = tpu.matmul %0, %1, %cst {dimension_numbers = #tpu.dot_dimension_numbers<[1], [0], [0], [1], [0, 0, 1, 1], [], []>} : vector<16x32xf32>, vector<32x32xf32>, vector<16x32xf32> -> vector<16x32xf32>
    %c0_3 = arith.constant 0 : index
    %c0_4 = arith.constant 0 : index
    %3 = vector.load %arg2[%c0_3, %c0_4] : memref<16x32xf32, #tpu.memory_space<vmem>>, vector<16x32xf32>
    %4 = arith.addf %2, %3 : vector<16x32xf32>
    %cst_5 = arith.constant dense<0.000000e+00> : vector<16xf32>
    %5 = vector.multi_reduction <add>, %4, %cst_5 [1] : vector<16x32xf32> to vector<16xf32>
    %6 = vector.shape_cast %5 : vector<16xf32> to vector<16x1xf32>
    %cst_6 = arith.constant 3.200000e+01 : f32
    %7 = vector.broadcast %cst_6 : f32 to vector<16x1xf32>
    %8 = arith.divf %6, %7 : vector<16x1xf32>
    %9 = vector.broadcast %8 : vector<16x1xf32> to vector<16x32xf32>
    %10 = arith.subf %4, %9 : vector<16x32xf32>
    %11 = arith.mulf %10, %10 : vector<16x32xf32>
    %cst_7 = arith.constant dense<0.000000e+00> : vector<16xf32>
    %12 = vector.multi_reduction <add>, %11, %cst_7 [1] : vector<16x32xf32> to vector<16xf32>
    %13 = vector.shape_cast %12 : vector<16xf32> to vector<16x1xf32>
    %cst_8 = arith.constant 3.200000e+01 : f32
    %14 = vector.broadcast %cst_8 : f32 to vector<16x1xf32>
    %15 = arith.divf %13, %14 : vector<16x1xf32>
    %16 = vector.broadcast %8 : vector<16x1xf32> to vector<16x32xf32>
    %17 = arith.subf %4, %16 : vector<16x32xf32>
    %cst_9 = arith.constant 9.99999974E-6 : f32
    %18 = vector.broadcast %cst_9 : f32 to vector<16x1xf32>
    %19 = arith.addf %15, %18 : vector<16x1xf32>
    %20 = math.rsqrt %19 : vector<16x1xf32>
    %21 = vector.broadcast %20 : vector<16x1xf32> to vector<16x32xf32>
    %22 = arith.mulf %17, %21 : vector<16x32xf32>
    %c0_10 = arith.constant 0 : index
    %c0_11 = arith.constant 0 : index
    %23 = vector.load %arg4[%c0_10, %c0_11] : memref<1x32xf32, #tpu.memory_space<vmem>>, vector<1x32xf32>
    %24 = vector.broadcast %23 : vector<1x32xf32> to vector<16x32xf32>
    %25 = arith.mulf %22, %24 : vector<16x32xf32>
    %c0_12 = arith.constant 0 : index
    %c0_13 = arith.constant 0 : index
    %26 = vector.load %arg5[%c0_12, %c0_13] : memref<1x32xf32, #tpu.memory_space<vmem>>, vector<1x32xf32>
    %27 = vector.broadcast %26 : vector<1x32xf32> to vector<16x32xf32>
    %28 = arith.addf %25, %27 : vector<16x32xf32>
    %c0_14 = arith.constant 0 : index
    %c0_15 = arith.constant 0 : index
    %29 = vector.load %arg6[%c0_14, %c0_15] : memref<16x32xf32, #tpu.memory_space<vmem>>, vector<16x32xf32>
    tpu.vector_store %arg6[%c0_14, %c0_15], %28 {strides = array<i32>} : memref<16x32xf32, #tpu.memory_space<vmem>>, vector<16x32xf32>,
    return
  }
  func.func @transform_0(%arg0: i32) -> (i32, i32) {
    %c0_i32 = arith.constant 0 : i32
    %c0_i32_0 = arith.constant 0 : i32
    return %arg0, %c0_i32 : i32, i32
  }
  func.func @transform_1(%arg0: i32) -> (i32, i32) {
    %c0_i32 = arith.constant 0 : i32
    %c0_i32_0 = arith.constant 0 : i32
    return %arg0, %c0_i32 : i32, i32
  }
  func.func @transform_2(%arg0: i32) -> (i32, i32) {
    %c0_i32 = arith.constant 0 : i32
    %c0_i32_0 = arith.constant 0 : i32
    %c0_i32_1 = arith.constant 0 : i32
    return %c0_i32, %c0_i32_0 : i32, i32
  }
  func.func @transform_3(%arg0: i32) -> (i32, i32) {
    %c0_i32 = arith.constant 0 : i32
    %c0_i32_0 = arith.constant 0 : i32
    %c0_i32_1 = arith.constant 0 : i32
    return %c0_i32, %c0_i32_0 : i32, i32
  }
  func.func @transform_4(%arg0: i32) -> (i32, i32) {
    %c0_i32 = arith.constant 0 : i32
    %c0_i32_0 = arith.constant 0 : i32
    %c0_i32_1 = arith.constant 0 : i32
    return %c0_i32, %c0_i32_0 : i32, i32
  }
  func.func @transform_5(%arg0: i32) -> (i32, i32) {
    %c0_i32 = arith.constant 0 : i32
    %c0_i32_0 = arith.constant 0 : i32
    return %arg0, %c0_i32 : i32, i32
  }
}

</mosaic_0001>

<llo_original>
// kernel: multi_head_attention.3
$region0: #{multi_head_attention.3}
  #allocation0 [shape = 'u32[]', space=smem, size = 0x4, offset = 0x4, fixed_abs, tag = 'smem constant byte address 0x4 - core index']
  #allocation1 [shape = 'u32[144,128]{1,0:T(1,128)}', space=vmem, size = 0x12000, scoped, tag = 'internal scratch']
  %s0 = inlined_call_operand.vmem [shape: f32[16,32], index: 0, kind: input, shape index: {}]
  %s1 = inlined_call_operand.vmem [shape: f32[32,96], index: 1, kind: input, shape index: {}]
  %s2 = inlined_call_operand.vmem [shape: f32[16,96], index: 2, kind: output, shape index: {}]
  %s3 = sld [smem:[#allocation0]]
  $region18: #{multi_head_attention.3} parent=0
    _
  %s5 = ssub.s32 1, %s3
  %s6 = scalar_select 0, %s5, %s3
  // Predicated region
  $region2: #{multi_head_attention.3} parent=0 // pred_check
    _
  $region3: #{multi_head_attention.3} parent=0 // pred_check_branch
    %8 = sbr.rel (0) target = $region5
  $region4: #{multi_head_attention.3} parent=0 // pred_region
    _
  $region5: #{multi_head_attention.3} parent=0 // pred_fallthru
    _
  // Predicated region
  $region6: #{multi_head_attention.3} parent=0 // pred_check
    _
  $region7: #{multi_head_attention.3} parent=0 // pred_check_branch
    %10 = sbr.rel (0) target = $region9
  $region8: #{multi_head_attention.3} parent=0 // pred_region
    _
  $region9: #{multi_head_attention.3} parent=0 // pred_fallthru
    _
  %v11 = vld [vmem:[%s0] sm:$0xff]
  %v12 = vld [vmem:[%s0 + $0x8] sm:$0xff]
  %v13 = vld [vmem:[%s1] sm:$0xff]
  %v14 = vld [vmem:[%s1 + $0x8] sm:$0xff]
  %v15 = vld [vmem:[%s1 + $0x10] sm:$0xff]
  %v16 = vld [vmem:[%s1 + $0x18] sm:$0xff]
  %vm17 = vcmask 261120
  %v19 = vsel %vm17, %v11, 0
  %v22 = vsel %vm17, %v12, 0
  %24 = vmatprep.subr.mxu0 0.0
  %25 = vmatpush1.msra.mxu0 0.0
  %26 = vmatprep.subr.mxu0 0.0
  %27 = vmatpush1.msra.mxu0 0.0
  %28 = vmatprep.subr.mxu0 0.0
  %29 = vmatpush1.msra.mxu0 0.0
  %30 = vmatprep.subr.mxu0 0.0
  %31 = vmatpush1.msra.mxu0 0.0
  %32 = vmatprep.subr.mxu0 0.0
  %33 = vmatpush1.msra.mxu0 0.0
  %34 = vmatprep.subr.mxu0 0.0
  %35 = vmatpush1.msra.mxu0 0.0
  %36 = vmatprep.subr.mxu0 0.0
  %37 = vmatpush1.msra.mxu0 0.0
  %38 = vmatprep.subr.mxu0 0.0
  %39 = vmatpush1.msra.mxu0 0.0
  %40 = vmatprep.subr.mxu0 0.0
  %41 = vmatpush1.msra.mxu0 0.0
  %42 = vmatprep.subr.mxu0 0.0
  %43 = vmatpush1.msra.mxu0 0.0
  %44 = vmatprep.subr.mxu0 0.0
  %45 = vmatpush1.msra.mxu0 0.0
  %46 = vmatprep.subr.mxu0 0.0
  %47 = vmatpush1.msra.mxu0 0.0
  %48 = vmatprep.subr.mxu0 0.0
  %49 = vmatpush1.msra.mxu0 %v16
  %50 = vmatprep.subr.mxu0 0.0
  %51 = vmatpush1.msra.mxu0 %v15
  %52 = vmatprep.subr.mxu0 0.0
  %53 = vmatpush1.msra.mxu0 %v14
  %54 = vmatprep.subr.mxu0 0.0
  %55 = vmatpush1.msra.mxu0 %v13
  %56 = vmatprep.subr.mxu0 0.0
  %57 = vmatpush2.msra.mxu0 0.0
  %58 = vmatprep.subr.mxu0 0.0
  %59 = vmatpush2.msra.mxu0 0.0
  %60 = vmatprep.subr.mxu0 0.0
  %61 = vmatpush2.msra.mxu0 0.0
  %62 = vmatprep.subr.mxu0 0.0
  %63 = vmatpush2.msra.mxu0 0.0
  %64 = vmatprep.subr.mxu0 0.0
  %65 = vmatpush2.msra.mxu0 0.0
  %66 = vmatprep.subr.mxu0 0.0
  %67 = vmatpush2.msra.mxu0 0.0
  %68 = vmatprep.subr.mxu0 0.0
  %69 = vmatpush2.msra.mxu0 0.0
  %70 = vmatprep.subr.mxu0 0.0
  %71 = vmatpush2.msra.mxu0 0.0
  %72 = vmatprep.subr.mxu0 0.0
  %73 = vmatpush2.msra.mxu0 0.0
  %74 = vmatprep.subr.mxu0 0.0
  %75 = vmatpush2.msra.mxu0 0.0
  %76 = vmatprep.subr.mxu0 0.0
  %77 = vmatpush2.msra.mxu0 0.0
  %78 = vmatprep.subr.mxu0 0.0
  %79 = vmatpush2.msra.mxu0 0.0
  %80 = vmatprep.subr.mxu0 0.0
  %81 = vmatpush2.msra.mxu0 0.0
  %82 = vmatprep.subr.mxu0 0.0
  %83 = vmatpush2.msra.mxu0 0.0
  %84 = vmatprep.subr.mxu0 0.0
  %85 = vmatpush2.msra.mxu0 0.0
  %86 = vmatprep.subr.mxu0 0.0
  %87 = vmatpush2.msra.mxu0 0.0
  %88 = vmatprep.mubr.f32.mxu0 0.0
  %89 = vmatmul.mubr.f32.gmra.mxu0 %v19
  %v90 = vpop.f32.mrf.mxu0
  %v91 = vadd.f32 0.0, %v90
  %v92 = vpop.f32.mrf.mxu0
  %93 = vmatprep.mubr.f32.mxu0 0.0
  %94 = vmatmul.mubr.f32.gmra.mxu0 %v22
  %v95 = vpop.f32.mrf.mxu0
  %v96 = vadd.f32 0.0, %v95
  %v97 = vpop.f32.mrf.mxu0
  %98 = vdwg.mxu0
  %vm99 = vcmask 785408
  %100 = vst.msk [vmem:[%s2] sm:$0xff] %vm99, %v91
  %101 = vst.msk [vmem:[%s2 + $0x8] sm:$0xff] %vm99, %v96
  // Predicated region
  $region10: #{multi_head_attention.3} parent=0 // pred_check
    _
  $region11: #{multi_head_attention.3} parent=0 // pred_check_branch
    %103 = sbr.rel (0) target = $region13
  $region12: #{multi_head_attention.3} parent=0 // pred_region
    _
  $region13: #{multi_head_attention.3} parent=0 // pred_fallthru
    _
  // Predicated region
  $region14: #{multi_head_attention.3} parent=0 // pred_check
    _
  $region15: #{multi_head_attention.3} parent=0 // pred_check_branch
    %105 = sbr.rel (0) target = $region17
  $region16: #{multi_head_attention.3} parent=0 // pred_region
    _
  $region17: #{multi_head_attention.3} parent=0 // pred_fallthru
    _

// kernel: multi_head_attention.5
$region0: #{multi_head_attention.5}
  #allocation0 [shape = 'u32[]', space=smem, size = 0x4, offset = 0x4, fixed_abs, tag = 'smem constant byte address 0x4 - core index']
  #allocation1 [shape = 'u32[144,128]{1,0:T(1,128)}', space=vmem, size = 0x12000, scoped, tag = 'internal scratch']
  %s0 = inlined_call_operand.vmem [shape: f32[16,32], index: 0, kind: input, shape index: {}]
  %s1 = inlined_call_operand.vmem [shape: f32[16,32], index: 1, kind: input, shape index: {}]
  %s2 = inlined_call_operand.vmem [shape: f32[32,32], index: 2, kind: input, shape index: {}]
  %s3 = inlined_call_operand.vmem [shape: f32[1,32], index: 3, kind: input, shape index: {}]
  %s4 = inlined_call_operand.vmem [shape: f32[1,32], index: 4, kind: input, shape index: {}]
  %s5 = inlined_call_operand.hbm [shape: f32[16,32], index: 5, kind: output, shape index: {}]
  %s6 = sld [smem:[#allocation0]]
  $region30: #{multi_head_attention.5} parent=0
    _
  %s8 = ssub.s32 1, %s6
  %s9 = scalar_select 0, %s8, %s6
  $region1: #{multi_head_attention.5} parent=0
    #allocation2 [shape = 'u8[8192]{0}', space=vmem, size = 0x2000, scoped, tag = 'output window, operand 0, single buffered']
    #allocation3 [shape = 's32[1]{0}', space=sflag, size = 0x4, scoped, tag = 'scoped memory for multi_head_attention.5']
    %10 = vsyncpa [#allocation3], 0
    // Predicated region
    $region2: #{multi_head_attention.5} parent=1 // pred_check
      _
    $region3: #{multi_head_attention.5} parent=1 // pred_check_branch
      %12 = sbr.rel (0) target = $region5
    $region4: #{multi_head_attention.5} parent=1 // pred_region
      _
    $region5: #{multi_head_attention.5} parent=1 // pred_fallthru
      _
    // Predicated region
    $region6: #{multi_head_attention.5} parent=1 // pred_check
      _
    $region7: #{multi_head_attention.5} parent=1 // pred_check_branch
      %14 = sbr.rel (0) target = $region9
    $region8: #{multi_head_attention.5} parent=1 // pred_region
      _
    $region9: #{multi_head_attention.5} parent=1 // pred_fallthru
      _
    // Predicated region
    $region10: #{multi_head_attention.5} parent=1 // pred_check
      _
    $region11: #{multi_head_attention.5} parent=1 // pred_check_branch
      %16 = sbr.rel (0) target = $region13
    $region12: #{multi_head_attention.5} parent=1 // pred_region
      _
    $region13: #{multi_head_attention.5} parent=1 // pred_fallthru
      _
    // Predicated region
    $region14: #{multi_head_attention.5} parent=1 // pred_check
      _
    $region15: #{multi_head_attention.5} parent=1 // pred_check_branch
      %18 = sbr.rel (0) target = $region17
    $region16: #{multi_head_attention.5} parent=1 // pred_region
      _
    $region17: #{multi_head_attention.5} parent=1 // pred_fallthru
      _
    // Predicated region
    $region18: #{multi_head_attention.5} parent=1 // pred_check
      _
    $region19: #{multi_head_attention.5} parent=1 // pred_check_branch
      %20 = sbr.rel (0) target = $region21
    $region20: #{multi_head_attention.5} parent=1 // pred_region
      _
    $region21: #{multi_head_attention.5} parent=1 // pred_fallthru
      _
    %v21 = vld [vmem:[%s0] sm:$0xff]
    %v22 = vld [vmem:[%s0 + $0x8] sm:$0xff]
    %v23 = vld [vmem:[%s2] sm:$0xff]
    %v24 = vld [vmem:[%s2 + $0x8] sm:$0xff]
    %v25 = vld [vmem:[%s2 + $0x10] sm:$0xff]
    %v26 = vld [vmem:[%s2 + $0x18] sm:$0xff]
    %v27 = vld [vmem:[%s1] sm:$0xff]
    %v28 = vld [vmem:[%s1 + $0x8] sm:$0xff]
    %vm29 = vcmask 261120
    %v31 = vsel %vm29, %v21, 0
    %v34 = vsel %vm29, %v22, 0
    %36 = vmatprep.subr.mxu0 0.0
    %37 = vmatpush1.msra.mxu0 0.0
    %38 = vmatprep.subr.mxu0 0.0
    %39 = vmatpush1.msra.mxu0 0.0
    %40 = vmatprep.subr.mxu0 0.0
    %41 = vmatpush1.msra.mxu0 0.0
    %42 = vmatprep.subr.mxu0 0.0
    %43 = vmatpush1.msra.mxu0 0.0
    %44 = vmatprep.subr.mxu0 0.0
    %45 = vmatpush1.msra.mxu0 0.0
    %46 = vmatprep.subr.mxu0 0.0
    %47 = vmatpush1.msra.mxu0 0.0
    %48 = vmatprep.subr.mxu0 0.0
    %49 = vmatpush1.msra.mxu0 0.0
    %50 = vmatprep.subr.mxu0 0.0
    %51 = vmatpush1.msra.mxu0 0.0
    %52 = vmatprep.subr.mxu0 0.0
    %53 = vmatpush1.msra.mxu0 0.0
    %54 = vmatprep.subr.mxu0 0.0
    %55 = vmatpush1.msra.mxu0 0.0
    %56 = vmatprep.subr.mxu0 0.0
    %57 = vmatpush1.msra.mxu0 0.0
    %58 = vmatprep.subr.mxu0 0.0
    %59 = vmatpush1.msra.mxu0 0.0
    %60 = vmatprep.subr.mxu0 0.0
    %61 = vmatpush1.msra.mxu0 %v26
    %62 = vmatprep.subr.mxu0 0.0
    %63 = vmatpush1.msra.mxu0 %v25
    %64 = vmatprep.subr.mxu0 0.0
    %65 = vmatpush1.msra.mxu0 %v24
    %66 = vmatprep.subr.mxu0 0.0
    %67 = vmatpush1.msra.mxu0 %v23
    %68 = vmatprep.subr.mxu0 0.0
    %69 = vmatpush2.msra.mxu0 0.0
    %70 = vmatprep.subr.mxu0 0.0
    %71 = vmatpush2.msra.mxu0 0.0
    %72 = vmatprep.subr.mxu0 0.0
    %73 = vmatpush2.msra.mxu0 0.0
    %74 = vmatprep.subr.mxu0 0.0
    %75 = vmatpush2.msra.mxu0 0.0
    %76 = vmatprep.subr.mxu0 0.0
    %77 = vmatpush2.msra.mxu0 0.0
    %78 = vmatprep.subr.mxu0 0.0
    %79 = vmatpush2.msra.mxu0 0.0
    %80 = vmatprep.subr.mxu0 0.0
    %81 = vmatpush2.msra.mxu0 0.0
    %82 = vmatprep.subr.mxu0 0.0
    %83 = vmatpush2.msra.mxu0 0.0
    %84 = vmatprep.subr.mxu0 0.0
    %85 = vmatpush2.msra.mxu0 0.0
    %86 = vmatprep.subr.mxu0 0.0
    %87 = vmatpush2.msra.mxu0 0.0
    %88 = vmatprep.subr.mxu0 0.0
    %89 = vmatpush2.msra.mxu0 0.0
    %90 = vmatprep.subr.mxu0 0.0
    %91 = vmatpush2.msra.mxu0 0.0
    %92 = vmatprep.subr.mxu0 0.0
    %93 = vmatpush2.msra.mxu0 0.0
    %94 = vmatprep.subr.mxu0 0.0
    %95 = vmatpush2.msra.mxu0 0.0
    %96 = vmatprep.subr.mxu0 0.0
    %97 = vmatpush2.msra.mxu0 0.0
    %98 = vmatprep.subr.mxu0 0.0
    %99 = vmatpush2.msra.mxu0 0.0
    %100 = vmatprep.mubr.f32.mxu0 0.0
    %101 = vmatmul.mubr.f32.gmra.mxu0 %v31
    %v102 = vpop.f32.mrf.mxu0
    %v103 = vadd.f32 %v27, %v102
    %v104 = vpop.f32.mrf.mxu0
    %105 = vmatprep.mubr.f32.mxu0 0.0
    %106 = vmatmul.mubr.f32.gmra.mxu0 %v34
    %v107 = vpop.f32.mrf.mxu0
    %v108 = vadd.f32 %v28, %v107
    %v109 = vpop.f32.mrf.mxu0
    %110 = vdwg.mxu0
    %v111 = vsel %vm29, %v103, 0.0
    %112 = vadd.xlane.f32.xlu0 %v111
    %v113 = vpop.xlane.xlu0 %112
    %v114 = vsel %vm29, %v108, 0.0
    %115 = vadd.xlane.f32.xlu0 %v114
    %v116 = vpop.xlane.xlu0 %115
    %v117 = vrcp.pop 32.0
    %v118 = vmul.f32 %v113, %v117
    %v119 = vmul.f32 %v116, %v117
    %v120 = vsub.f32 %v103, %v118
    %v121 = vsub.f32 %v108, %v119
    %v122 = vmul.f32 %v120, %v120
    %v123 = vmul.f32 %v121, %v121
    %v124 = vsel %vm29, %v122, 0.0
    %125 = vadd.xlane.f32.xlu0 %v124
    %v126 = vpop.xlane.xlu0 %125
    %v127 = vsel %vm29, %v123, 0.0
    %128 = vadd.xlane.f32.xlu0 %v127
    %v129 = vpop.xlane.xlu0 %128
    %v130 = vmul.f32 %v126, %v117
    %v131 = vmul.f32 %v129, %v117
    %v132 = vadd.f32 %v130, 1e-05
    %v133 = vadd.f32 %v131, 1e-05
    %v134 = vrsqrt.pop %v132
    %v135 = vrsqrt.pop %v133
    %v136 = vmul.f32 %v120, %v134
    %v137 = vmul.f32 %v121, %v135
    %v138 = vld [vmem:[%s3] sm:$0x1]
    %v140 = vlaneseq
    %v141 = vshrl.u32 %v140, 7
    %v142 = vsub.s32 0, %v141
    %v143 = vrot.slane %v138, %v142
    %v145 = vmul.f32 %v136, %v143
    %v146 = vmul.f32 %v137, %v143
    %v147 = vld [vmem:[%s4] sm:$0x1]
    %v149 = vlaneseq
    %v150 = vshrl.u32 %v149, 7
    %v151 = vsub.s32 0, %v150
    %v152 = vrot.slane %v147, %v151
    %v154 = vadd.f32 %v145, %v152
    %v155 = vadd.f32 %v146, %v152
    %156 = vst.msk [vmem:[#allocation2] sm:$0xff] %vm29, %v154
    %157 = vst.msk [vmem:[#allocation2 + $0x8] sm:$0xff] %vm29, %v155
    // Predicated region
    $region22: #{multi_head_attention.5} parent=1 // pred_check
      _
    $region23: #{multi_head_attention.5} parent=1 // pred_check_branch
      %159 = sbr.rel (0) target = $region25
    $region24: #{multi_head_attention.5} parent=1 // pred_region
      %s161 = ssub.s32 256, 256
      %162 = vsyncadd [#allocation3], %s161
      %s163 = sshll.u32 [#allocation2], 4
      %s164 = int_to_ptr.vmem [resolvable:$true] %s163
      %169 = dma.vmem_to_hbm [thread:$0]  %s164, 256, %s5, [#allocation3], 128, 128, 8
    $region25: #{multi_head_attention.5} parent=1 // pred_fallthru
      _
    // Predicated region
    $region26: #{multi_head_attention.5} parent=1 // pred_check
      _
    $region27: #{multi_head_attention.5} parent=1 // pred_check_branch
      %171 = sbr.rel (0) target = $region29
    $region28: #{multi_head_attention.5} parent=1 // pred_region
      %172 = dma.done [#allocation3], 256
    $region29: #{multi_head_attention.5} parent=1 // pred_fallthru
      _
    %173 = vsyncpa [#allocation3], 1

// kernel: multi_head_attention.4
$region0: #{multi_head_attention.4}
  #allocation0 [shape = 'u32[]', space=smem, size = 0x4, offset = 0x4, fixed_abs, tag = 'smem constant byte address 0x4 - core index']
  #allocation1 [shape = 'u32[144,128]{1,0:T(1,128)}', space=vmem, size = 0x12000, scoped, tag = 'internal scratch']
  #allocation2 [shape = 'f32[8,1]{1,0:T(8,128)}', space=vmem, size = 0x1000, scoped, tag = 'scratch operand']
  #allocation3 [shape = 'f32[8,1]{1,0:T(8,128)}', space=vmem, size = 0x1000, scoped, tag = 'scratch operand']
  #allocation4 [shape = 'f32[8,8]{1,0:T(8,128)}', space=vmem, size = 0x1000, scoped, tag = 'scratch operand']
  %s0 = inlined_call_operand.vmem [shape: f32[8,8,8], index: 0, kind: input, shape index: {}]
  %s1 = inlined_call_operand.vmem [shape: f32[8,8,8], index: 1, kind: input, shape index: {}]
  %s2 = inlined_call_operand.vmem [shape: f32[8,8,8], index: 2, kind: input, shape index: {}]
  %s3 = inlined_call_operand.vmem [shape: f32[8,8,8], index: 3, kind: output, shape index: {}]
  %s4 = sld [smem:[#allocation0]]
  $region53: #{multi_head_attention.4} parent=0
    _
  %s6 = ssub.s32 1, %s4
  %s7 = scalar_select 0, %s6, %s4
  loop: start=0, step=1, limit=10
  $region2: #{multi_head_attention.4} parent=0 // loop_pre_header
    _
  $region3: #{multi_head_attention.4} parent=0 // loop_header
    %s9 = sphi 0, %s13
    %p10 = scmp.ge.s32.totalorder %s9, 10
    %s16 = sphi 0, %s35
    %s17 = sphi 0, %s31
    %s18 = sphi 0, %s27
    %s19 = sphi 0, %s16
    %s20 = sphi 0, %s17
    %s21 = sphi 0, %s18
    %s22 = sphi 0, %s19
    %s23 = sphi 0, %s20
    %s24 = sphi 0, %s21
    %s40 = sphi 0, %s42
    %s43 = sphi 0, %s40
    %s44 = sphi 0, %s43
    %s60 = sphi 0, %s44
    %s68 = sphi 0, %s70
    %s71 = sphi 0, %s68
    %s72 = sphi 0, %s71
    %s88 = sphi 0, %s72
    %s96 = sphi 0, %s98
    %s99 = sphi 0, %s96
    %s100 = sphi 0, %s99
    %s116 = sphi 0, %s100
    %s124 = sphi 0, %s126
    %s127 = sphi 0, %s124
    %s128 = sphi 0, %s127
    %s144 = sphi 0, %s128
  $region4: #{multi_head_attention.4} parent=0 // loop_header_branch
    %12 = sbr.rel (%p10) target = $region8
  $region5: #{multi_head_attention.4} parent=0 // loop_body
    %s14 = ssub.s32 %s9, 1
    %s15 = ssub.s32 %s9, 2
    %s25 = sadd.s32 1, %s18
    %p26 = scmp.ge.s32.totalorder %s25, 1
    %s27 = scalar_select %p26, 0, %s25
    %s28 = sadd.s32 1, %s17
    %s29 = scalar_select %p26, %s28, %s17
    %p30 = scmp.ge.s32.totalorder %s29, 1
    %s31 = scalar_select %p30, 0, %s29
    %s32 = sadd.s32 1, %s16
    %s33 = scalar_select %p30, %s32, %s16
    %p34 = scmp.ge.s32.totalorder %s33, 8
    %s35 = scalar_select %p34, 0, %s33
    %s36 = ssub.s32 %s16, %s35
    %s37 = ssub.s32 %s17, %s31
    %s38 = sor.u32 %s36, %s37
    %p39 = scmp.eq.s32.totalorder %s38, 0
    %s41 = sadd.s32 %s40, 1
    %s42 = scalar_select %p39, %s40, %s41
    %p45 = pneg %p39
    %p46 = scmp.eq.s32.totalorder %s9, 7
    %p47 = por %p45, %p46
    %p48 = scmp.ne.s32.totalorder %s40, %s43
    %p49 = scmp.eq.s32.totalorder %s9, 0
    %p50 = por %p48, %p49
    %p51 = scmp.ne.s32.totalorder %s40, %s43
    %p52 = scmp.eq.s32.totalorder %s14, 7
    %p53 = por %p51, %p52
    %p54 = scmp.ne.s32.totalorder %s43, %s44
    %p55 = scmp.eq.s32.totalorder %s14, 0
    %p56 = por %p54, %p55
    %p57 = scmp.ne.s32.totalorder %s43, %s44
    %p58 = scmp.eq.s32.totalorder %s15, 7
    %p59 = por %p57, %p58
    %p61 = scmp.ne.s32.totalorder %s44, %s60
    %p62 = scmp.eq.s32.totalorder %s15, 0
    %p63 = por %p61, %p62
    %s64 = ssub.s32 %s16, %s35
    %s65 = ssub.s32 %s18, %s27
    %s66 = sor.u32 %s64, %s65
    %p67 = scmp.eq.s32.totalorder %s66, 0
    %s69 = sadd.s32 %s68, 1
    %s70 = scalar_select %p67, %s68, %s69
    %p73 = pneg %p67
    %p74 = scmp.eq.s32.totalorder %s9, 7
    %p75 = por %p73, %p74
    %p76 = scmp.ne.s32.totalorder %s68, %s71
    %p77 = scmp.eq.s32.totalorder %s9, 0
    %p78 = por %p76, %p77
    %p79 = scmp.ne.s32.totalorder %s68, %s71
    %p80 = scmp.eq.s32.totalorder %s14, 7
    %p81 = por %p79, %p80
    %p82 = scmp.ne.s32.totalorder %s71, %s72
    %p83 = scmp.eq.s32.totalorder %s14, 0
    %p84 = por %p82, %p83
    %p85 = scmp.ne.s32.totalorder %s71, %s72
    %p86 = scmp.eq.s32.totalorder %s15, 7
    %p87 = por %p85, %p86
    %p89 = scmp.ne.s32.totalorder %s72, %s88
    %p90 = scmp.eq.s32.totalorder %s15, 0
    %p91 = por %p89, %p90
    %s92 = ssub.s32 %s16, %s35
    %s93 = ssub.s32 %s18, %s27
    %s94 = sor.u32 %s92, %s93
    %p95 = scmp.eq.s32.totalorder %s94, 0
    %s97 = sadd.s32 %s96, 1
    %s98 = scalar_select %p95, %s96, %s97
    %p101 = pneg %p95
    %p102 = scmp.eq.s32.totalorder %s9, 7
    %p103 = por %p101, %p102
    %p104 = scmp.ne.s32.totalorder %s96, %s99
    %p105 = scmp.eq.s32.totalorder %s9, 0
    %p106 = por %p104, %p105
    %p107 = scmp.ne.s32.totalorder %s96, %s99
    %p108 = scmp.eq.s32.totalorder %s14, 7
    %p109 = por %p107, %p108
    %p110 = scmp.ne.s32.totalorder %s99, %s100
    %p111 = scmp.eq.s32.totalorder %s14, 0
    %p112 = por %p110, %p111
    %p113 = scmp.ne.s32.totalorder %s99, %s100
    %p114 = scmp.eq.s32.totalorder %s15, 7
    %p115 = por %p113, %p114
    %p117 = scmp.ne.s32.totalorder %s100, %s116
    %p118 = scmp.eq.s32.totalorder %s15, 0
    %p119 = por %p117, %p118
    %s120 = ssub.s32 %s16, %s35
    %s121 = ssub.s32 %s17, %s31
    %s122 = sor.u32 %s120, %s121
    %p123 = scmp.eq.s32.totalorder %s122, 0
    %s125 = sadd.s32 %s124, 1
    %s126 = scalar_select %p123, %s124, %s125
    %p129 = pneg %p123
    %p130 = scmp.eq.s32.totalorder %s9, 7
    %p131 = por %p129, %p130
    %p132 = scmp.ne.s32.totalorder %s124, %s127
    %p133 = scmp.eq.s32.totalorder %s9, 0
    %p134 = por %p132, %p133
    %p135 = scmp.ne.s32.totalorder %s124, %s127
    %p136 = scmp.eq.s32.totalorder %s14, 7
    %p137 = por %p135, %p136
    %p138 = scmp.ne.s32.totalorder %s127, %s128
    %p139 = scmp.eq.s32.totalorder %s14, 0
    %p140 = por %p138, %p139
    %p141 = scmp.ne.s32.totalorder %s127, %s128
    %p142 = scmp.eq.s32.totalorder %s15, 7
    %p143 = por %p141, %p142
    %p145 = scmp.ne.s32.totalorder %s128, %s144
    %p146 = scmp.eq.s32.totalorder %s15, 0
    %p147 = por %p145, %p146
    %p148 = scmp.le.s32.totalorder 1, %s9
    %p149 = scmp.lt.s32.totalorder %s9, 9
    %p150 = pnand %p148, %p149
    %p151 = pneg %p150
    // Predicated region
    $region9: #{multi_head_attention.4} parent=5 // pred_check
      _
    $region10: #{multi_head_attention.4} parent=5 // pred_check_branch
      %153 = sbr.rel (%p150) target = $region12
    $region11: #{multi_head_attention.4} parent=5 // pred_region
      %s154 = ssub.s32 %s9, 1
    $region12: #{multi_head_attention.4} parent=5 // pred_fallthru
      _
    %p155 = scmp.lt.s32.totalorder %s9, 8
    // Predicated region
    $region13: #{multi_head_attention.4} parent=5 // pred_check
      %p156 = pneg %p155
    $region14: #{multi_head_attention.4} parent=5 // pred_check_branch
      %158 = sbr.rel (%p156) target = $region16
    $region15: #{multi_head_attention.4} parent=5 // pred_region
      // Predicated region
      $region17: #{multi_head_attention.4} parent=15 // pred_check
        %p159 = pneg %p50
      $region18: #{multi_head_attention.4} parent=15 // pred_check_branch
        %161 = sbr.rel (%p159) target = $region20
      $region19: #{multi_head_attention.4} parent=15 // pred_region
        %p162 = scmp.lt.s32.totalorder %s16, 7
        %s163 = scalar_select %p162, %s16, 7
        %p164 = scmp.lt.s32.totalorder %s17, 0
        %s165 = scalar_select %p164, %s17, 0
        %s166 = sadd.s32 %s165, %s163
        %s167 = smul.addr %s166, 8
        %s168 = scalar_lea.vmem %s0, %s167
      $region20: #{multi_head_attention.4} parent=15 // pred_fallthru
        _
      // Predicated region
      $region21: #{multi_head_attention.4} parent=15 // pred_check
        %p169 = pneg %p78
      $region22: #{multi_head_attention.4} parent=15 // pred_check_branch
        %171 = sbr.rel (%p169) target = $region24
      $region23: #{multi_head_attention.4} parent=15 // pred_region
        %p172 = scmp.lt.s32.totalorder %s16, 7
        %s173 = scalar_select %p172, %s16, 7
        %p174 = scmp.lt.s32.totalorder %s18, 0
        %s175 = scalar_select %p174, %s18, 0
        %s176 = sadd.s32 %s175, %s173
        %s177 = smul.addr %s176, 8
        %s178 = scalar_lea.vmem %s1, %s177
      $region24: #{multi_head_attention.4} parent=15 // pred_fallthru
        _
      // Predicated region
      $region25: #{multi_head_attention.4} parent=15 // pred_check
        %p179 = pneg %p106
      $region26: #{multi_head_attention.4} parent=15 // pred_check_branch
        %181 = sbr.rel (%p179) target = $region28
      $region27: #{multi_head_attention.4} parent=15 // pred_region
        %p182 = scmp.lt.s32.totalorder %s16, 7
        %s183 = scalar_select %p182, %s16, 7
        %p184 = scmp.lt.s32.totalorder %s18, 0
        %s185 = scalar_select %p184, %s18, 0
        %s186 = sadd.s32 %s185, %s183
        %s187 = smul.addr %s186, 8
        %s188 = scalar_lea.vmem %s2, %s187
      $region28: #{multi_head_attention.4} parent=15 // pred_fallthru
        _
    $region16: #{multi_head_attention.4} parent=5 // pred_fallthru
      _
    %p189 = scmp.le.s32.totalorder 1, %s9
    %p190 = scmp.lt.s32.totalorder %s9, 9
    %p191 = pnand %p189, %p190
    %p192 = pneg %p191
    // Predicated region
    $region29: #{multi_head_attention.4} parent=5 // pred_check
      _
    $region30: #{multi_head_attention.4} parent=5 // pred_check_branch
      %194 = sbr.rel (%p191) target = $region32
    $region31: #{multi_head_attention.4} parent=5 // pred_region
      %s195 = ssub.s32 %s9, 1
      %p196 = scmp.lt.s32.totalorder %s19, 7
      %s197 = scalar_select %p196, %s19, 7
      %p198 = scmp.lt.s32.totalorder %s20, 0
      %s199 = scalar_select %p198, %s20, 0
      %s200 = sadd.s32 %s199, %s197
      %s201 = smul.addr %s200, 8
      %s202 = scalar_lea.vmem %s0, %s201
      %p203 = pneg %p56
      %p204 = pneg %p53
      %p205 = scmp.lt.s32.totalorder %s19, 7
      %s206 = scalar_select %p205, %s19, 7
      %p207 = scmp.lt.s32.totalorder %s21, 0
      %s208 = scalar_select %p207, %s21, 0
      %s209 = sadd.s32 %s208, %s206
      %s210 = smul.addr %s209, 8
      %s211 = scalar_lea.vmem %s1, %s210
      %p212 = pneg %p84
      %p213 = pneg %p81
      %p214 = scmp.lt.s32.totalorder %s19, 7
      %s215 = scalar_select %p214, %s19, 7
      %p216 = scmp.lt.s32.totalorder %s21, 0
      %s217 = scalar_select %p216, %s21, 0
      %s218 = sadd.s32 %s217, %s215
      %s219 = smul.addr %s218, 8
      %s220 = scalar_lea.vmem %s2, %s219
      %p221 = pneg %p112
      %p222 = pneg %p109
      %p223 = pneg %p140
      %p224 = pneg %p137
      %p225 = scmp.lt.s32.totalorder %s19, 7
      %s226 = scalar_select %p225, %s19, 7
      %p227 = scmp.lt.s32.totalorder %s20, 0
      %s228 = scalar_select %p227, %s20, 0
      %s229 = sadd.s32 %s228, %s226
      %s230 = smul.addr %s229, 8
      %s231 = scalar_lea.vmem %s3, %s230
      %p232 = scmp.lt.s32.totalorder %s19, 7
      %s233 = scalar_select %p232, %s19, 7
      %p234 = scmp.lt.s32.totalorder %s20, 0
      %s235 = scalar_select %p234, %s20, 0
      %s236 = sadd.s32 %s235, %s233
      %s237 = smul.addr %s236, 8
      %s238 = scalar_lea.vmem %s0, %s237
      %p239 = scmp.lt.s32.totalorder %s19, 7
      %s240 = scalar_select %p239, %s19, 7
      %p241 = scmp.lt.s32.totalorder %s21, 0
      %s242 = scalar_select %p241, %s21, 0
      %s243 = sadd.s32 %s242, %s240
      %s244 = smul.addr %s243, 8
      %s245 = scalar_lea.vmem %s1, %s244
      %p246 = scmp.lt.s32.totalorder %s19, 7
      %s247 = scalar_select %p246, %s19, 7
      %p248 = scmp.lt.s32.totalorder %s21, 0
      %s249 = scalar_select %p248, %s21, 0
      %s250 = sadd.s32 %s249, %s247
      %s251 = smul.addr %s250, 8
      %s252 = scalar_lea.vmem %s2, %s251
      %p253 = scmp.lt.s32.totalorder %s19, 7
      %s254 = scalar_select %p253, %s19, 7
      %p255 = scmp.lt.s32.totalorder %s20, 0
      %s256 = scalar_select %p255, %s20, 0
      %s257 = sadd.s32 %s256, %s254
      %s258 = smul.addr %s257, 8
      %s259 = scalar_lea.vmem %s3, %s258
      %p260 = scmp.eq.s32.totalorder %s21, 0
      // Predicated region
      $region33: #{multi_head_attention.4} parent=31 // pred_check
        %p261 = pneg %p260
      $region34: #{multi_head_attention.4} parent=31 // pred_check_branch
        %263 = sbr.rel (%p261) target = $region36
      $region35: #{multi_head_attention.4} parent=31 // pred_region
        %vm264 = vcmask 7168
        %265 = vst.msk [vmem:[#allocation2] sm:$0xff] %vm264, -inf
        %266 = vst.msk [vmem:[#allocation3] sm:$0xff] %vm264, 0.0
        %vm267 = vcmask 64512
        %268 = vst.msk [vmem:[#allocation4] sm:$0xff] %vm267, 0.0
      $region36: #{multi_head_attention.4} parent=31 // pred_fallthru
        _
      %v269 = vld [vmem:[%s238] sm:$0xff]
      %v270 = vmul.f32 %v269, 0.35355338
      %v271 = vld [vmem:[%s245] sm:$0xff]
      %v272 = vld [vmem:[%s252] sm:$0xff]
      %vm273 = vcmask 64512
      %v275 = vsel %vm273, %v270, 0
      %v278 = vsel %vm273, %v271, 0
      %280 = vmatprep.subr.mxu0 0.0
      %281 = vmatpush1.xpose.msra.mxu0 0.0
      %282 = vmatprep.subr.mxu0 0.0
      %283 = vmatpush1.xpose.msra.mxu0 0.0
      %284 = vmatprep.subr.mxu0 0.0
      %285 = vmatpush1.xpose.msra.mxu0 0.0
      %286 = vmatprep.subr.mxu0 0.0
      %287 = vmatpush1.xpose.msra.mxu0 0.0
      %288 = vmatprep.subr.mxu0 0.0
      %289 = vmatpush1.xpose.msra.mxu0 0.0
      %290 = vmatprep.subr.mxu0 0.0
      %291 = vmatpush1.xpose.msra.mxu0 0.0
      %292 = vmatprep.subr.mxu0 0.0
      %293 = vmatpush1.xpose.msra.mxu0 0.0
      %294 = vmatprep.subr.mxu0 0.0
      %295 = vmatpush1.xpose.msra.mxu0 0.0
      %296 = vmatprep.subr.mxu0 0.0
      %297 = vmatpush1.xpose.msra.mxu0 0.0
      %298 = vmatprep.subr.mxu0 0.0
      %299 = vmatpush1.xpose.msra.mxu0 0.0
      %300 = vmatprep.subr.mxu0 0.0
      %301 = vmatpush1.xpose.msra.mxu0 0.0
      %302 = vmatprep.subr.mxu0 0.0
      %303 = vmatpush1.xpose.msra.mxu0 0.0
      %304 = vmatprep.subr.mxu0 0.0
      %305 = vmatpush1.xpose.msra.mxu0 0.0
      %306 = vmatprep.subr.mxu0 0.0
      %307 = vmatpush1.xpose.msra.mxu0 0.0
      %308 = vmatprep.subr.mxu0 0.0
      %309 = vmatpush1.xpose.msra.mxu0 0.0
      %310 = vmatprep.subr.mxu0 0.0
      %311 = vmatpush1.xpose.msra.mxu0 %v278
      %312 = vmatprep.subr.mxu0 0.0
      %313 = vmatpush2.xpose.msra.mxu0 0.0
      %314 = vmatprep.subr.mxu0 0.0
      %315 = vmatpush2.xpose.msra.mxu0 0.0
      %316 = vmatprep.subr.mxu0 0.0
      %317 = vmatpush2.xpose.msra.mxu0 0.0
      %318 = vmatprep.subr.mxu0 0.0
      %319 = vmatpush2.xpose.msra.mxu0 0.0
      %320 = vmatprep.subr.mxu0 0.0
      %321 = vmatpush2.xpose.msra.mxu0 0.0
      %322 = vmatprep.subr.mxu0 0.0
      %323 = vmatpush2.xpose.msra.mxu0 0.0
      %324 = vmatprep.subr.mxu0 0.0
      %325 = vmatpush2.xpose.msra.mxu0 0.0
      %326 = vmatprep.subr.mxu0 0.0
      %327 = vmatpush2.xpose.msra.mxu0 0.0
      %328 = vmatprep.subr.mxu0 0.0
      %329 = vmatpush2.xpose.msra.mxu0 0.0
      %330 = vmatprep.subr.mxu0 0.0
      %331 = vmatpush2.xpose.msra.mxu0 0.0
      %332 = vmatprep.subr.mxu0 0.0
      %333 = vmatpush2.xpose.msra.mxu0 0.0
      %334 = vmatprep.subr.mxu0 0.0
      %335 = vmatpush2.xpose.msra.mxu0 0.0
      %336 = vmatprep.subr.mxu0 0.0
      %337 = vmatpush2.xpose.msra.mxu0 0.0
      %338 = vmatprep.subr.mxu0 0.0
      %339 = vmatpush2.xpose.msra.mxu0 0.0
      %340 = vmatprep.subr.mxu0 0.0
      %341 = vmatpush2.xpose.msra.mxu0 0.0
      %342 = vmatprep.subr.mxu0 0.0
      %343 = vmatpush2.xpose.msra.mxu0 0.0
      %344 = vmatprep.mubr.f32.mxu0 0.0
      %345 = vmatmul.mubr.f32.gmra.mxu0 %v275
      %v346 = vpop.f32.mrf.mxu0
      %v347 = vadd.f32 0.0, %v346
      %v348 = vpop.f32.mrf.mxu0
      %349 = vdwg.mxu0
      %v350 = vld [vmem:[#allocation2] sm:$0xff]
      %v351 = vsel %vm273, %v347, -inf
      %352 = vmax.xlane.f32.xlu0 %v351
      %v353 = vpop.xlane.xlu0 %352
      %v354 = vmax.f32 %v350, %v353
      %v355 = vsub.f32 %v350, %v354
      %v356 = vmul.f32 %v355, 1.442695
      %v357 = vpow.pop %v356
      %359 = vset.pattern.permute.xlu0 0
      %360 = vperm.xlu0 %359, %v354
      %v361 = vpop.permute.xlu0 %360
      %v363 = vsub.f32 %v347, %v361
      %v364 = vmul.f32 %v363, 1.442695
      %v365 = vpow.pop %v364
      %v366 = vld [vmem:[#allocation3] sm:$0xff]
      %v367 = vmul.f32 %v357, %v366
      %v368 = vsel %vm273, %v365, 0.0
      %369 = vadd.xlane.f32.xlu0 %v368
      %v370 = vpop.xlane.xlu0 %369
      %v371 = vadd.f32 %v367, %v370
      %vm372 = vcmask 7168
      %373 = vst.msk [vmem:[#allocation3] sm:$0xff] %vm372, %v371
      %v374 = vld [vmem:[#allocation4] sm:$0xff]
      %376 = vset.pattern.permute.xlu0 0
      %377 = vperm.xlu0 %376, %v357
      %v378 = vpop.permute.xlu0 %377
      %v380 = vmul.f32 %v378, %v374
      %v382 = vsel %vm273, %v365, 0
      %384 = vmatprep.subr.mxu0 0.0
      %385 = vmatpush1.msra.mxu0 0.0
      %386 = vmatprep.subr.mxu0 0.0
      %387 = vmatpush1.msra.mxu0 0.0
      %388 = vmatprep.subr.mxu0 0.0
      %389 = vmatpush1.msra.mxu0 0.0
      %390 = vmatprep.subr.mxu0 0.0
      %391 = vmatpush1.msra.mxu0 0.0
      %392 = vmatprep.subr.mxu0 0.0
      %393 = vmatpush1.msra.mxu0 0.0
      %394 = vmatprep.subr.mxu0 0.0
      %395 = vmatpush1.msra.mxu0 0.0
      %396 = vmatprep.subr.mxu0 0.0
      %397 = vmatpush1.msra.mxu0 0.0
      %398 = vmatprep.subr.mxu0 0.0
      %399 = vmatpush1.msra.mxu0 0.0
      %400 = vmatprep.subr.mxu0 0.0
      %401 = vmatpush1.msra.mxu0 0.0
      %402 = vmatprep.subr.mxu0 0.0
      %403 = vmatpush1.msra.mxu0 0.0
      %404 = vmatprep.subr.mxu0 0.0
      %405 = vmatpush1.msra.mxu0 0.0
      %406 = vmatprep.subr.mxu0 0.0
      %407 = vmatpush1.msra.mxu0 0.0
      %408 = vmatprep.subr.mxu0 0.0
      %409 = vmatpush1.msra.mxu0 0.0
      %410 = vmatprep.subr.mxu0 0.0
      %411 = vmatpush1.msra.mxu0 0.0
      %412 = vmatprep.subr.mxu0 0.0
      %413 = vmatpush1.msra.mxu0 0.0
      %414 = vmatprep.subr.mxu0 0.0
      %415 = vmatpush1.msra.mxu0 %v272
      %416 = vmatprep.subr.mxu0 0.0
      %417 = vmatpush2.msra.mxu0 0.0
      %418 = vmatprep.subr.mxu0 0.0
      %419 = vmatpush2.msra.mxu0 0.0
      %420 = vmatprep.subr.mxu0 0.0
      %421 = vmatpush2.msra.mxu0 0.0
      %422 = vmatprep.subr.mxu0 0.0
      %423 = vmatpush2.msra.mxu0 0.0
      %424 = vmatprep.subr.mxu0 0.0
      %425 = vmatpush2.msra.mxu0 0.0
      %426 = vmatprep.subr.mxu0 0.0
      %427 = vmatpush2.msra.mxu0 0.0
      %428 = vmatprep.subr.mxu0 0.0
      %429 = vmatpush2.msra.mxu0 0.0
      %430 = vmatprep.subr.mxu0 0.0
      %431 = vmatpush2.msra.mxu0 0.0
      %432 = vmatprep.subr.mxu0 0.0
      %433 = vmatpush2.msra.mxu0 0.0
      %434 = vmatprep.subr.mxu0 0.0
      %435 = vmatpush2.msra.mxu0 0.0
      %436 = vmatprep.subr.mxu0 0.0
      %437 = vmatpush2.msra.mxu0 0.0
      %438 = vmatprep.subr.mxu0 0.0
      %439 = vmatpush2.msra.mxu0 0.0
      %440 = vmatprep.subr.mxu0 0.0
      %441 = vmatpush2.msra.mxu0 0.0
      %442 = vmatprep.subr.mxu0 0.0
      %443 = vmatpush2.msra.mxu0 0.0
      %444 = vmatprep.subr.mxu0 0.0
      %445 = vmatpush2.msra.mxu0 0.0
      %446 = vmatprep.subr.mxu0 0.0
      %447 = vmatpush2.msra.mxu0 0.0
      %448 = vmatprep.mubr.f32.mxu0 0.0
      %449 = vmatmul.mubr.f32.gmra.mxu0 %v382
      %v450 = vpop.f32.mrf.mxu0
      %v451 = vadd.f32 0.0, %v450
      %v452 = vpop.f32.mrf.mxu0
      %453 = vdwg.mxu0
      %v454 = vadd.f32 %v380, %v451
      %455 = vst.msk [vmem:[#allocation4] sm:$0xff] %vm273, %v454
      %456 = vst.msk [vmem:[#allocation2] sm:$0xff] %vm372, %v354
      // Predicated region
      $region37: #{multi_head_attention.4} parent=31 // pred_check
        %p457 = pneg %p260
      $region38: #{multi_head_attention.4} parent=31 // pred_check_branch
        %459 = sbr.rel (%p457) target = $region40
      $region39: #{multi_head_attention.4} parent=31 // pred_region
        %v460 = vld [vmem:[#allocation3] sm:$0xff]
        %v461 = vrcp.pop %v460
        %v462 = vmul.f32 1.0, %v461
        %v463 = vld [vmem:[#allocation4] sm:$0xff]
        %465 = vset.pattern.permute.xlu0 0
        %466 = vperm.xlu0 %465, %v462
        %v467 = vpop.permute.xlu0 %466
        %v469 = vmul.f32 %v463, %v467
        %470 = vst.msk [vmem:[%s259] sm:$0xff] %vm273, %v469
      $region40: #{multi_head_attention.4} parent=31 // pred_fallthru
        _
      %p471 = scmp.lt.s32.totalorder %s19, 7
      %s472 = scalar_select %p471, %s19, 7
      %p473 = scmp.lt.s32.totalorder %s20, 0
      %s474 = scalar_select %p473, %s20, 0
      %s475 = sadd.s32 %s474, %s472
      %s476 = smul.addr %s475, 8
      %s477 = scalar_lea.vmem %s3, %s476
      // Predicated region
      $region41: #{multi_head_attention.4} parent=31 // pred_check
        %p478 = pneg %p137
      $region42: #{multi_head_attention.4} parent=31 // pred_check_branch
        %480 = sbr.rel (%p478) target = $region44
      $region43: #{multi_head_attention.4} parent=31 // pred_region
        _
      $region44: #{multi_head_attention.4} parent=31 // pred_fallthru
        _
    $region32: #{multi_head_attention.4} parent=5 // pred_fallthru
      _
    %p481 = scmp.le.s32.totalorder 2, %s9
    // Predicated region
    $region45: #{multi_head_attention.4} parent=5 // pred_check
      %p482 = pneg %p481
    $region46: #{multi_head_attention.4} parent=5 // pred_check_branch
      %484 = sbr.rel (%p482) target = $region48
    $region47: #{multi_head_attention.4} parent=5 // pred_region
      %s485 = ssub.s32 %s9, 2
      // Predicated region
      $region49: #{multi_head_attention.4} parent=47 // pred_check
        %p486 = pneg %p143
      $region50: #{multi_head_attention.4} parent=47 // pred_check_branch
        %488 = sbr.rel (%p486) target = $region52
      $region51: #{multi_head_attention.4} parent=47 // pred_region
        %p489 = scmp.lt.s32.totalorder %s22, 7
        %s490 = scalar_select %p489, %s22, 7
        %p491 = scmp.lt.s32.totalorder %s23, 0
        %s492 = scalar_select %p491, %s23, 0
        %s493 = sadd.s32 %s492, %s490
        %s494 = smul.addr %s493, 8
        %s495 = scalar_lea.vmem %s3, %s494
      $region52: #{multi_head_attention.4} parent=47 // pred_fallthru
        _
    $region48: #{multi_head_attention.4} parent=5 // pred_fallthru
      _
  $region6: #{multi_head_attention.4} parent=0 // loop_footer
    %s13 = sadd.s32 1, %s9
  $region7: #{multi_head_attention.4} parent=0 // loop_footer_branch
    %8 = sbr.rel target = $region3
  $region8: #{multi_head_attention.4} parent=0 // loop_exit
    _

</llo_original>
